<compile_context>
chip_gen: v6e
topology: v6e:2x2x1
jax: 0.10.0
libtpu: 0.0.40
codegen_flags: <defaults>
</compile_context>

<pallas_src>
import functools

import numpy as np
import jax
import jax.numpy as jnp
from jax import lax
from jax.experimental import pallas as pl
from jax.experimental.pallas import tpu as pltpu


# ---------------------------------------------------------------------------
# Pallas kernel: fused horizontal MXU matmul + per-plane vertical matmul,
# with reflect padding baked into the two matrices.
# ---------------------------------------------------------------------------
def _blur_kernel(hmat_ref, vmat_ref, x_ref, out_ref, tmp_ref, *, precision):
    """hmat_ref: (W, W) f32 right-multiply matrix (reflect pad + horiz taps)
    vmat_ref: (H, H) f32 left-multiply matrix  (reflect pad + vert taps)
    x_ref   : (B, H, W) input planes (original dtype)
    out_ref : (B, H, W) output planes (original dtype)
    tmp_ref : (B, H, W) f32 VMEM scratch (horizontal-pass result)."""
    block_b, h, w = x_ref.shape
    hmat = hmat_ref[...]
    vmat = vmat_ref[...]

    # ---- Horizontal pass: one fused (B*H, W) @ (W, W) matmul ----------------
    if h % 8 == 0:
        # Cast first so the reshape merges leading dims on an f32 (8,128)
        # layout (free when H is a multiple of the sublane count).
        x2 = x_ref[...].astype(jnp.float32).reshape(block_b * h, w)
        tmp_ref[...] = jnp.dot(
            x2, hmat, preferred_element_type=jnp.float32, precision=precision
        ).reshape(block_b, h, w)
    else:
        # Layout-safe fallback for H not a multiple of 8.
        def hbody(b, carry):
            tmp_ref[b] = jnp.dot(
                x_ref[b].astype(jnp.float32), hmat,
                preferred_element_type=jnp.float32, precision=precision)
            return carry

        lax.fori_loop(0, block_b, hbody, 0, unroll=True)

    # ---- Vertical pass: per-plane (H, H) @ (H, W) ---------------------------
    to_int = bool(jnp.issubdtype(out_ref.dtype, jnp.integer))

    def vbody(b, carry):
        res = jnp.dot(vmat, tmp_ref[b], preferred_element_type=jnp.float32,
                      precision=precision)
        if to_int:
            info = jnp.iinfo(out_ref.dtype)
            # torchvision rounds for integer dtypes; clamp so fp error can't
            # push values past the dtype range before the cast.
            res = jnp.clip(jnp.round(res), float(info.min), float(info.max))
        out_ref[b] = res.astype(out_ref.dtype)
        return carry

    lax.fori_loop(0, block_b, vbody, 0, unroll=True)


# ---------------------------------------------------------------------------
# Host-side helpers
# ---------------------------------------------------------------------------
def _gaussian_kernel1d(kernel_size: int, sigma: float) -> np.ndarray:
    # Matches torchvision._get_gaussian_kernel1d
    half = (kernel_size - 1) * 0.5
    xs = np.linspace(-half, half, kernel_size)
    pdf = np.exp(-0.5 * (xs / sigma) ** 2)
    return (pdf / pdf.sum()).astype(np.float32)


def _blur_matrix(n: int, kernel_size: int, taps: np.ndarray) -> np.ndarray:
    """(n, n) matrix M with (M @ x)[i] == sum_k taps[k] * reflect_pad(x)[i + k].
    Built with vectorized numpy (no per-element Python loops)."""
    pad = kernel_size // 2
    idx = np.pad(np.arange(n), (pad, pad), mode="reflect") if pad > 0 else np.arange(n)
    rows = np.repeat(np.arange(n), kernel_size)
    cols = idx[np.arange(n)[:, None] + np.arange(kernel_size)[None, :]].ravel()
    vals = np.tile(taps.astype(np.float64), n)
    m = np.zeros((n, n), np.float64)
    np.add.at(m, (rows, cols), vals)
    return m.astype(np.float32)


def _vmem_caps():
    """(scoped_limit_cap, block_budget) derived from physical VMEM.
    v5e/v6e: 128 MiB physical; v7x: 64 MiB.  Never request all of it."""
    try:
        cap = int(pltpu.get_tpu_info().vmem_capacity_bytes)
    except Exception:
        cap = 64 << 20  # conservative fallback: assume v7x-sized VMEM
    limit_cap = (cap * 3) // 4       # ~48 MiB on v7x, ~96 MiB on v5e/v6e
    block_budget = limit_cap // 2    # share the pipelined blocks may use
    return limit_cap, block_budget


def _block_bytes(block_b: int, h: int, w: int, itemsize: int) -> int:
    per = block_b * h * w
    return (2 * 2 * per * itemsize        # in + out blocks, double-buffered
            + 3 * per * 4                 # f32 scratch + in-kernel f32 temps
            + 2 * 4 * (h * h + w * w))    # hmat + vmat, double-buffered, f32


def _pick_plane_block(nc: int, h: int, w: int, itemsize: int, budget: int) -> int:
    """Planes per grid step: amortize the ~0.35us per-step overhead but keep
    the blocks inside the per-generation VMEM budget and keep >=4 grid steps
    when possible (>=2 steps per v7x TensorCore so the pipeline engages)."""
    candidates = [b for b in range(1, min(nc, 16) + 1) if nc % b == 0]
    for min_steps in (4, 2, 1):
        ok = [b for b in candidates
              if _block_bytes(b, h, w, itemsize) <= budget and nc // b >= min_steps]
        if ok:
            return max(ok)
    return 1  # TODO(synk): row-band tiling for planes that exceed the budget.


@functools.lru_cache(maxsize=None)
def _build_blur_call(nc: int, h: int, w: int, dtype, block_b: int,
                     highest_precision: bool):
    dtype = np.dtype(dtype)
    precision = lax.Precision.HIGHEST if highest_precision else None

    limit_cap, _ = _vmem_caps()
    need = _block_bytes(block_b, h, w, dtype.itemsize) + (4 << 20)
    # Always set the scoped limit: v5e's default is only 16 MiB; cap it below
    # physical VMEM so the compiler keeps headroom for its own scratch.
    vmem_limit = int(min(limit_cap, max(need, 16 << 20)))

    kernel = functools.partial(_blur_kernel, precision=precision)
    call = pl.pallas_call(
        kernel,
        out_shape=jax.ShapeDtypeStruct((nc, h, w), dtype),
        grid=(nc // block_b,),
        in_specs=[
            pl.BlockSpec((w, w), lambda i: (0, 0)),            # hmat (constant)
            pl.BlockSpec((h, h), lambda i: (0, 0)),            # vmat (constant)
            pl.BlockSpec((block_b, h, w), lambda i: (i, 0, 0)),
        ],
        out_specs=pl.BlockSpec((block_b, h, w), lambda i: (i, 0, 0)),
        scratch_shapes=[pltpu.VMEM((block_b, h, w), jnp.float32)],
        compiler_params=pltpu.CompilerParams(
            dimension_semantics=("parallel",),
            vmem_limit_bytes=vmem_limit,
        ),
    )
    return jax.jit(call)


def gaussian_blur_pallas(img: jax.Array, sigma: float) -> jax.Array:
    """img: (N, C, H, W). torchvision-style gaussian_blur with
    kernel_size = 1 + 2 * round(sigma * 4.0) and reflect padding."""
    sigma = float(sigma)
    kernel_size = 1 + 2 * int(round(sigma * 4.0))
    taps = _gaussian_kernel1d(kernel_size, max(sigma, 1e-6))

    N, C, H, W = img.shape
    nc = N * C
    dtype = np.dtype(img.dtype)
    _, block_budget = _vmem_caps()
    block_b = _pick_plane_block(nc, H, W, dtype.itemsize, block_budget)

    # bf16-pass MXU precision is fine for float images; for integer images use
    # HIGHEST so rounding back to the integer grid matches the exact conv.
    highest = bool(jnp.issubdtype(dtype, jnp.integer))

    # Reflect padding + separable conv folded into two banded matrices (data,
    # not shapes -> no recompilation across sigma draws).
    # TODO(synk): build these on-device from the (ks,) tap vector to avoid the
    # per-draw H2D transfer for very large images.
    hmat = jnp.asarray(_blur_matrix(W, kernel_size, taps).T)   # right-multiply
    vmat = jnp.asarray(_blur_matrix(H, kernel_size, taps))     # left-multiply

    fn = _build_blur_call(nc, H, W, dtype, block_b, highest)
    out = fn(hmat, vmat, img.reshape(nc, H, W))
    return out.reshape(N, C, H, W)


class RandomGaussianBlurPallas:
    """JAX/Pallas port of RandomGaussianBlur.

    The apply-or-not decision and the sigma sample are host-level randomness
    (matching the reference module's use of Python `random`), drawn from an
    explicit numpy Generator so the whole script is deterministic and no
    device values are synced back to the host.
    """

    def __init__(self, p: float = 0.5, sigma=(0.0, 3.0)):
        self.p = p
        self.sigma = sigma

    def __call__(self, img: jax.Array, rng: np.random.Generator) -> jax.Array:
        # TODO(synk): host-level branching like the PyTorch module; not
        # traceable under jit/vmap (same behaviour as `random.random()`).
        if rng.uniform() < self.p:
            s = float(rng.uniform(self.sigma[0], self.sigma[1]))
            img = gaussian_blur_pallas(img, s)
        return img


# ---------------------------------------------------------------------------
# Pure-JAX reference (reflect pad + separable shifted-slice conv) for checking.
# ---------------------------------------------------------------------------
def _reference_blur(img: jax.Array, sigma: float) -> jax.Array:
    sigma = float(sigma)
    ks = 1 + 2 * int(round(sigma * 4.0))
    taps = _gaussian_kernel1d(ks, max(sigma, 1e-6))
    pad = ks // 2
    N, C, H, W = img.shape
    x = img.reshape(N * C, H, W).astype(jnp.float32)
    if pad > 0:
        x = jnp.pad(x, ((0, 0), (pad, pad), (pad, pad)), mode="reflect")
    tmp = sum(float(taps[k]) * x[:, :, k:k + W] for k in range(ks))
    out = sum(float(taps[k]) * tmp[:, k:k + H, :] for k in range(ks))
    if jnp.issubdtype(img.dtype, jnp.integer):
        info = jnp.iinfo(img.dtype)
        out = jnp.clip(jnp.round(out), float(info.min), float(info.max))
    return out.reshape(N, C, H, W).astype(img.dtype)


if __name__ == "__main__":
    key = jax.random.PRNGKey(0)
    x = jax.random.normal(key, (2, 4, 16, 16), dtype=jnp.float32)

    # p=1.0 so the blur branch (and the Pallas kernel) is guaranteed to run.
    module = RandomGaussianBlurPallas(p=1.0, sigma=(0.0, 3.0))
    rng = np.random.default_rng(0)
    y = jax.block_until_ready(module(x, rng))
    assert y.shape == x.shape and y.dtype == x.dtype
    assert bool(jnp.all(jnp.isfinite(y)))

    # Float check at a fixed sigma (default MXU precision -> loose tolerance).
    sig = 1.7
    y_k = jax.block_until_ready(gaussian_blur_pallas(x, sig))
    y_r = _reference_blur(x, sig)
    max_err = float(jnp.max(jnp.abs(y_k.astype(jnp.float32) - y_r.astype(jnp.float32))))
    assert max_err < 5e-2, f"float max_err={max_err}"

    # Integer (uint8) check: HIGHEST precision + round + clamp in the kernel;
    # allow at most 1 LSB of rounding-boundary difference vs the reference.
    x_u8 = jax.random.randint(jax.random.PRNGKey(1), (1, 3, 16, 16), 0, 256,
                              dtype=jnp.int32).astype(jnp.uint8)
    sig_u8 = 1.3
    yu_k = jax.block_until_ready(gaussian_blur_pallas(x_u8, sig_u8))
    yu_r = _reference_blur(x_u8, sig_u8)
    assert yu_k.dtype == x_u8.dtype
    int_err = int(jnp.max(jnp.abs(yu_k.astype(jnp.int32) - yu_r.astype(jnp.int32))))
    assert int_err <= 1, f"uint8 max_err={int_err}"

    print("KERNEL_OK")
</pallas_src>

<mosaic_0001>
module attributes {stable_mosaic.version = 11 : i64} {
  func.func @_blur_kernel(%arg0: i32, %arg1: memref<16x16xf32, #tpu.memory_space<vmem>>, %arg2: memref<16x16xf32, #tpu.memory_space<vmem>>, %arg3: memref<2x16x16xf32, #tpu.memory_space<vmem>>, %arg4: memref<2x16x16xf32, #tpu.memory_space<vmem>>, %arg5: memref<2x16x16xf32, #tpu.memory_space<vmem>>) attributes {dimension_semantics = [#tpu.dimension_semantics<parallel>], iteration_bounds = array<i64: 4>, scalar_prefetch = 0 : i64, scratch_operands = 1 : i64, tpu.core_type = #tpu.core_type<tc>, window_params = [{pipeline_mode = #tpu.pipeline_mode<synchronous>, transform_indices = @transform_0, window_bounds = array<i64: 16, 16>}, {pipeline_mode = #tpu.pipeline_mode<synchronous>, transform_indices = @transform_1, window_bounds = array<i64: 16, 16>}, {transform_indices = @transform_2, window_bounds = array<i64: 2, 16, 16>}, {transform_indices = @transform_3, window_bounds = array<i64: 2, 16, 16>}]} {
    %c0 = arith.constant 0 : index
    %c0_0 = arith.constant 0 : index
    %0 = vector.load %arg1[%c0, %c0_0] : memref<16x16xf32, #tpu.memory_space<vmem>>, vector<16x16xf32>
    %c0_1 = arith.constant 0 : index
    %c0_2 = arith.constant 0 : index
    %1 = vector.load %arg2[%c0_1, %c0_2] : memref<16x16xf32, #tpu.memory_space<vmem>>, vector<16x16xf32>
    %c0_3 = arith.constant 0 : index
    %c0_4 = arith.constant 0 : index
    %c0_5 = arith.constant 0 : index
    %2 = vector.load %arg3[%c0_3, %c0_4, %c0_5] : memref<2x16x16xf32, #tpu.memory_space<vmem>>, vector<2x16x16xf32>
    %3 = vector.shape_cast %2 : vector<2x16x16xf32> to vector<32x16xf32>
    %cst = arith.constant dense<0.000000e+00> : vector<32x16xf32>
    %4 = tpu.matmul %3, %0, %cst {dimension_numbers = #tpu.dot_dimension_numbers<[1], [0], [0], [1], [0, 0, 1, 1], [], []>} : vector<32x16xf32>, vector<16x16xf32>, vector<32x16xf32> -> vector<32x16xf32>
    %5 = vector.shape_cast %4 : vector<32x16xf32> to vector<2x16x16xf32>
    %c0_6 = arith.constant 0 : index
    %c0_7 = arith.constant 0 : index
    %c0_8 = arith.constant 0 : index
    %6 = vector.load %arg5[%c0_6, %c0_7, %c0_8] : memref<2x16x16xf32, #tpu.memory_space<vmem>>, vector<2x16x16xf32>
    tpu.vector_store %arg5[%c0_6, %c0_7, %c0_8], %5 {strides = array<i32>} : memref<2x16x16xf32, #tpu.memory_space<vmem>>, vector<2x16x16xf32>,
    %c0_i32 = arith.constant 0 : i32
    %7 = arith.index_cast %c0_i32 : i32 to index
    %c0_9 = arith.constant 0 : index
    %c0_10 = arith.constant 0 : index
    %8 = vector.load %arg5[%7, %c0_9, %c0_10] : memref<2x16x16xf32, #tpu.memory_space<vmem>>, vector<1x16x16xf32>
    %9 = vector.shape_cast %8 : vector<1x16x16xf32> to vector<16x16xf32>
    %cst_11 = arith.constant dense<0.000000e+00> : vector<16x16xf32>
    %10 = tpu.matmul %1, %9, %cst_11 {dimension_numbers = #tpu.dot_dimension_numbers<[1], [0], [0], [1], [0, 0, 1, 1], [], []>} : vector<16x16xf32>, vector<16x16xf32>, vector<16x16xf32> -> vector<16x16xf32>
    %11 = arith.index_cast %c0_i32 : i32 to index
    %c0_12 = arith.constant 0 : index
    %c0_13 = arith.constant 0 : index
    %12 = vector.load %arg4[%11, %c0_12, %c0_13] : memref<2x16x16xf32, #tpu.memory_space<vmem>>, vector<1x16x16xf32>
    %13 = vector.shape_cast %12 : vector<1x16x16xf32> to vector<16x16xf32>
    %14 = vector.shape_cast %10 : vector<16x16xf32> to vector<1x16x16xf32>
    tpu.vector_store %arg4[%11, %c0_12, %c0_13], %14 {strides = array<i32>} : memref<2x16x16xf32, #tpu.memory_space<vmem>>, vector<1x16x16xf32>,
    %c1_i32 = arith.constant 1 : i32
    %15 = arith.index_cast %c1_i32 : i32 to index
    %c0_14 = arith.constant 0 : index
    %c0_15 = arith.constant 0 : index
    %16 = vector.load %arg5[%15, %c0_14, %c0_15] : memref<2x16x16xf32, #tpu.memory_space<vmem>>, vector<1x16x16xf32>
    %17 = vector.shape_cast %16 : vector<1x16x16xf32> to vector<16x16xf32>
    %cst_16 = arith.constant dense<0.000000e+00> : vector<16x16xf32>
    %18 = tpu.matmul %1, %17, %cst_16 {dimension_numbers = #tpu.dot_dimension_numbers<[1], [0], [0], [1], [0, 0, 1, 1], [], []>} : vector<16x16xf32>, vector<16x16xf32>, vector<16x16xf32> -> vector<16x16xf32>
    %19 = arith.index_cast %c1_i32 : i32 to index
    %c0_17 = arith.constant 0 : index
    %c0_18 = arith.constant 0 : index
    %20 = vector.load %arg4[%19, %c0_17, %c0_18] : memref<2x16x16xf32, #tpu.memory_space<vmem>>, vector<1x16x16xf32>
    %21 = vector.shape_cast %20 : vector<1x16x16xf32> to vector<16x16xf32>
    %22 = vector.shape_cast %18 : vector<16x16xf32> to vector<1x16x16xf32>
    tpu.vector_store %arg4[%19, %c0_17, %c0_18], %22 {strides = array<i32>} : memref<2x16x16xf32, #tpu.memory_space<vmem>>, vector<1x16x16xf32>,
    %c2_i32 = arith.constant 2 : i32
    return
  }
  func.func @transform_0(%arg0: i32) -> (i32, i32) {
    %c0_i32 = arith.constant 0 : i32
    %c0_i32_0 = arith.constant 0 : i32
    %c0_i32_1 = arith.constant 0 : i32
    return %c0_i32, %c0_i32_0 : i32, i32
  }
  func.func @transform_1(%arg0: i32) -> (i32, i32) {
    %c0_i32 = arith.constant 0 : i32
    %c0_i32_0 = arith.constant 0 : i32
    %c0_i32_1 = arith.constant 0 : i32
    return %c0_i32, %c0_i32_0 : i32, i32
  }
  func.func @transform_2(%arg0: i32) -> (i32, i32, i32) {
    %c0_i32 = arith.constant 0 : i32
    %c0_i32_0 = arith.constant 0 : i32
    %c0_i32_1 = arith.constant 0 : i32
    return %arg0, %c0_i32, %c0_i32_0 : i32, i32, i32
  }
  func.func @transform_3(%arg0: i32) -> (i32, i32, i32) {
    %c0_i32 = arith.constant 0 : i32
    %c0_i32_0 = arith.constant 0 : i32
    %c0_i32_1 = arith.constant 0 : i32
    return %arg0, %c0_i32, %c0_i32_0 : i32, i32, i32
  }
}

</mosaic_0001>

<llo_original>
// kernel: tpu_custom_call.1
$region0: #{tpu_custom_call.1}
  #allocation0 [shape = 'u32[]', space=smem, size = 0x4, offset = 0x4, fixed_abs, tag = 'smem constant byte address 0x4 - core index']
  #allocation1 [shape = 'u32[144,128]{1,0:T(1,128)}', space=vmem, size = 0x12000, scoped, tag = 'internal scratch']
  #allocation2 [shape = 'f32[2,16,16]{2,1,0:T(8,128)}', space=vmem, size = 0x4000, scoped, tag = 'scratch operand']
  %s0 = inlined_call_operand.hbm [shape: f32[16,16], index: 0, kind: input, shape index: {}]
  %s1 = inlined_call_operand.hbm [shape: f32[16,16], index: 1, kind: input, shape index: {}]
  %s2 = inlined_call_operand.hbm [shape: f32[8,16,16], index: 2, kind: input, shape index: {}]
  %s3 = inlined_call_operand.hbm [shape: f32[8,16,16], index: 3, kind: output, shape index: {}]
  %s4 = sld [smem:[#allocation0]]
  $region57: #{tpu_custom_call.1} parent=0
    _
  %s6 = ssub.s32 1, %s4
  %s7 = scalar_select 0, %s6, %s4
  $region1: #{tpu_custom_call.1} parent=0
    #allocation3 [shape = 'u8[8192]{0}', space=vmem, size = 0x2000, scoped, tag = 'input window, operand 0, single buffered']
    #allocation4 [shape = 's32[2]{0}', space=sflag, size = 0x8, scoped, tag = 'scoped memory for tpu_custom_call.1']
    #allocation5 [shape = 's32[2]{0}', space=sflag, size = 0x8, scoped, tag = 'scoped memory for tpu_custom_call.1']
    #allocation6 [shape = 'u8[8192]{0}', space=vmem, size = 0x2000, scoped, tag = 'input window, operand 1, single buffered']
    #allocation7 [shape = 's32[1]{0}', space=sflag, size = 0x4, scoped, tag = 'scoped memory for tpu_custom_call.1']
    #allocation8 [shape = 'u8[32768]{0}', space=vmem, size = 0x8000, scoped, tag = 'input window, operand 2']
    #allocation9 [shape = 'u8[32768]{0}', space=vmem, size = 0x8000, scoped, tag = 'output window, operand 0']
    %8 = vsyncpa [#allocation4], 0
    %9 = vsyncpa [#allocation7], 0
    %10 = vsyncpa [#allocation5], 0
    %s11 = scalar_lea.sflag [#allocation5], 1
    %12 = vsyncpa %s11, 0
    loop: start=0, step=1, limit=6
    $region2: #{tpu_custom_call.1} parent=1 // loop_pre_header
      _
    $region3: #{tpu_custom_call.1} parent=1 // loop_header
      %s14 = sphi 0, %s18
      %p15 = scmp.ge.s32.totalorder %s14, 6
      %s22 = sphi 0, %s22
      %s24 = sphi 0, %s22
      %s25 = sphi 0, %s24
      %s39 = sphi 0, %s25
      %s43 = sphi 0, %s43
      %s45 = sphi 0, %s43
      %s46 = sphi 0, %s45
      %s60 = sphi 0, %s46
      %s66 = sphi 0, %s68
      %s69 = sphi 0, %s66
      %s70 = sphi 0, %s69
      %s86 = sphi 0, %s70
      %s92 = sphi 0, %s94
      %s95 = sphi 0, %s92
      %s96 = sphi 0, %s95
      %s112 = sphi 0, %s96
    $region4: #{tpu_custom_call.1} parent=1 // loop_header_branch
      %17 = sbr.rel (%p15) target = $region8
    $region5: #{tpu_custom_call.1} parent=1 // loop_body
      %s19 = ssub.s32 %s14, 1
      %s20 = ssub.s32 %s14, 2
      %s21 = sadd.s32 %s14, 1
      %s23 = sadd.s32 %s22, 1
      %p26 = scmp.eq.s32.totalorder %s14, 3
      %p27 = scmp.ne.s32.totalorder %s22, %s24
      %p28 = scmp.eq.s32.totalorder %s14, 0
      %p29 = por %p27, %p28
      %p30 = scmp.ne.s32.totalorder %s22, %s24
      %p31 = scmp.eq.s32.totalorder %s19, 3
      %p32 = por %p30, %p31
      %p33 = scmp.ne.s32.totalorder %s24, %s25
      %p34 = scmp.eq.s32.totalorder %s19, 0
      %p35 = por %p33, %p34
      %p36 = scmp.ne.s32.totalorder %s24, %s25
      %p37 = scmp.eq.s32.totalorder %s20, 3
      %p38 = por %p36, %p37
      %p40 = scmp.ne.s32.totalorder %s25, %s39
      %p41 = scmp.eq.s32.totalorder %s20, 0
      %p42 = por %p40, %p41
      %s44 = sadd.s32 %s43, 1
      %p47 = scmp.eq.s32.totalorder %s14, 3
      %p48 = scmp.ne.s32.totalorder %s43, %s45
      %p49 = scmp.eq.s32.totalorder %s14, 0
      %p50 = por %p48, %p49
      %p51 = scmp.ne.s32.totalorder %s43, %s45
      %p52 = scmp.eq.s32.totalorder %s19, 3
      %p53 = por %p51, %p52
      %p54 = scmp.ne.s32.totalorder %s45, %s46
      %p55 = scmp.eq.s32.totalorder %s19, 0
      %p56 = por %p54, %p55
      %p57 = scmp.ne.s32.totalorder %s45, %s46
      %p58 = scmp.eq.s32.totalorder %s20, 3
      %p59 = por %p57, %p58
      %p61 = scmp.ne.s32.totalorder %s46, %s60
      %p62 = scmp.eq.s32.totalorder %s20, 0
      %p63 = por %p61, %p62
      %s64 = ssub.s32 %s14, %s21
      %p65 = scmp.eq.s32.totalorder %s64, 0
      %s67 = sadd.s32 %s66, 1
      %s68 = scalar_select %p65, %s66, %s67
      %p71 = pneg %p65
      %p72 = scmp.eq.s32.totalorder %s14, 3
      %p73 = por %p71, %p72
      %p74 = scmp.ne.s32.totalorder %s66, %s69
      %p75 = scmp.eq.s32.totalorder %s14, 0
      %p76 = por %p74, %p75
      %p77 = scmp.ne.s32.totalorder %s66, %s69
      %p78 = scmp.eq.s32.totalorder %s19, 3
      %p79 = por %p77, %p78
      %p80 = scmp.ne.s32.totalorder %s69, %s70
      %p81 = scmp.eq.s32.totalorder %s19, 0
      %p82 = por %p80, %p81
      %p83 = scmp.ne.s32.totalorder %s69, %s70
      %p84 = scmp.eq.s32.totalorder %s20, 3
      %p85 = por %p83, %p84
      %p87 = scmp.ne.s32.totalorder %s70, %s86
      %p88 = scmp.eq.s32.totalorder %s20, 0
      %p89 = por %p87, %p88
      %s90 = ssub.s32 %s14, %s21
      %p91 = scmp.eq.s32.totalorder %s90, 0
      %s93 = sadd.s32 %s92, 1
      %s94 = scalar_select %p91, %s92, %s93
      %p97 = pneg %p91
      %p98 = scmp.eq.s32.totalorder %s14, 3
      %p99 = por %p97, %p98
      %p100 = scmp.ne.s32.totalorder %s92, %s95
      %p101 = scmp.eq.s32.totalorder %s14, 0
      %p102 = por %p100, %p101
      %p103 = scmp.ne.s32.totalorder %s92, %s95
      %p104 = scmp.eq.s32.totalorder %s19, 3
      %p105 = por %p103, %p104
      %p106 = scmp.ne.s32.totalorder %s95, %s96
      %p107 = scmp.eq.s32.totalorder %s19, 0
      %p108 = por %p106, %p107
      %p109 = scmp.ne.s32.totalorder %s95, %s96
      %p110 = scmp.eq.s32.totalorder %s20, 3
      %p111 = por %p109, %p110
      %p113 = scmp.ne.s32.totalorder %s96, %s112
      %p114 = scmp.eq.s32.totalorder %s20, 0
      %p115 = por %p113, %p114
      %p116 = scmp.le.s32.totalorder 1, %s14
      %p117 = scmp.lt.s32.totalorder %s14, 5
      %p118 = pnand %p116, %p117
      %p119 = pneg %p118
      // Predicated region
      $region9: #{tpu_custom_call.1} parent=5 // pred_check
        _
      $region10: #{tpu_custom_call.1} parent=5 // pred_check_branch
        %121 = sbr.rel (%p118) target = $region12
      $region11: #{tpu_custom_call.1} parent=5 // pred_region
        %s122 = ssub.s32 %s14, 1
        // Predicated region
        $region13: #{tpu_custom_call.1} parent=11 // pred_check
          %p123 = pneg %p35
        $region14: #{tpu_custom_call.1} parent=11 // pred_check_branch
          %125 = sbr.rel (%p123) target = $region16
        $region15: #{tpu_custom_call.1} parent=11 // pred_region
          %s127 = ssub.s32 256, 256
          %128 = vsyncadd [#allocation4], %s127
          %s129 = sshll.u32 [#allocation3], 4
          %s130 = int_to_ptr.vmem [resolvable:$true] %s129
          %135 = dma.hbm_to_vmem [thread:$0]  %s0, 256, %s130, [#allocation4], 128, 128, 8
        $region16: #{tpu_custom_call.1} parent=11 // pred_fallthru
          _
        // Predicated region
        $region17: #{tpu_custom_call.1} parent=11 // pred_check
          %p136 = pneg %p56
        $region18: #{tpu_custom_call.1} parent=11 // pred_check_branch
          %138 = sbr.rel (%p136) target = $region20
        $region19: #{tpu_custom_call.1} parent=11 // pred_region
          %s140 = ssub.s32 256, 256
          %141 = vsyncadd [#allocation7], %s140
          %s142 = sshll.u32 [#allocation6], 4
          %s143 = int_to_ptr.vmem [resolvable:$true] %s142
          %148 = dma.hbm_to_vmem [thread:$0]  %s1, 256, %s143, [#allocation7], 128, 128, 8
        $region20: #{tpu_custom_call.1} parent=11 // pred_fallthru
          _
      $region12: #{tpu_custom_call.1} parent=5 // pred_fallthru
        _
      %p149 = scmp.lt.s32.totalorder %s14, 4
      // Predicated region
      $region21: #{tpu_custom_call.1} parent=5 // pred_check
        %p150 = pneg %p149
      $region22: #{tpu_custom_call.1} parent=5 // pred_check_branch
        %152 = sbr.rel (%p150) target = $region24
      $region23: #{tpu_custom_call.1} parent=5 // pred_region
        // Predicated region
        $region25: #{tpu_custom_call.1} parent=23 // pred_check
          %p153 = pneg %p76
        $region26: #{tpu_custom_call.1} parent=23 // pred_check_branch
          %155 = sbr.rel (%p153) target = $region28
        $region27: #{tpu_custom_call.1} parent=23 // pred_region
          %s156 = sand.u32 %s14, 1
          %s157 = scalar_lea.sflag [#allocation4], %s156
          %s158 = sand.u32 %s66, 1
          %s159 = smul.addr %s158, 32
          %s160 = scalar_lea.vmem [#allocation8], %s159
          %s161 = smul.u32 2, %s14
          %s163 = ssub.s32 512, 512
          %164 = vsyncadd %s157, %s163
          %s165 = smul.addr %s161, 2
          %s166 = smul.addr %s165, 128
          %s167 = scalar_lea.hbm %s2, %s166
          %s168 = sshll.u32 %s160, 4
          %s169 = int_to_ptr.vmem [resolvable:$true] %s168
          %174 = dma.hbm_to_vmem [thread:$0]  %s167, 512, %s169, %s157, 128, 128, 8
        $region28: #{tpu_custom_call.1} parent=23 // pred_fallthru
          _
      $region24: #{tpu_custom_call.1} parent=5 // pred_fallthru
        _
      %p175 = scmp.le.s32.totalorder 1, %s14
      %p176 = scmp.lt.s32.totalorder %s14, 5
      %p177 = pnand %p175, %p176
      %p178 = pneg %p177
      // Predicated region
      $region29: #{tpu_custom_call.1} parent=5 // pred_check
        _
      $region30: #{tpu_custom_call.1} parent=5 // pred_check_branch
        %180 = sbr.rel (%p177) target = $region32
      $region31: #{tpu_custom_call.1} parent=5 // pred_region
        %s181 = ssub.s32 %s14, 1
        // Predicated region
        $region33: #{tpu_custom_call.1} parent=31 // pred_check
          %p182 = pneg %p35
        $region34: #{tpu_custom_call.1} parent=31 // pred_check_branch
          %184 = sbr.rel (%p182) target = $region36
        $region35: #{tpu_custom_call.1} parent=31 // pred_region
          %185 = dma.done [#allocation4], 256
        $region36: #{tpu_custom_call.1} parent=31 // pred_fallthru
          _
        // Predicated region
        $region37: #{tpu_custom_call.1} parent=31 // pred_check
          %p186 = pneg %p56
        $region38: #{tpu_custom_call.1} parent=31 // pred_check_branch
          %188 = sbr.rel (%p186) target = $region40
        $region39: #{tpu_custom_call.1} parent=31 // pred_region
          %189 = dma.done [#allocation7], 256
        $region40: #{tpu_custom_call.1} parent=31 // pred_fallthru
          _
        %s190 = sand.u32 %s19, 1
        %s191 = scalar_lea.sflag [#allocation4], %s190
        %s192 = sand.u32 %s69, 1
        %s193 = smul.addr %s192, 32
        %s194 = scalar_lea.vmem [#allocation8], %s193
        // Predicated region
        $region41: #{tpu_custom_call.1} parent=31 // pred_check
          %p195 = pneg %p82
        $region42: #{tpu_custom_call.1} parent=31 // pred_check_branch
          %197 = sbr.rel (%p195) target = $region44
        $region43: #{tpu_custom_call.1} parent=31 // pred_region
          %198 = dma.done %s191, 512
        $region44: #{tpu_custom_call.1} parent=31 // pred_fallthru
          _
        %p199 = pneg %p35
        %p200 = pneg %p32
        %p201 = pneg %p56
        %p202 = pneg %p53
        %s203 = sand.u32 %s19, 1
        %s204 = scalar_lea.sflag [#allocation4], %s203
        %s205 = sand.u32 %s69, 1
        %s206 = smul.addr %s205, 32
        %s207 = scalar_lea.vmem [#allocation8], %s206
        %p208 = pneg %p82
        %p209 = pneg %p79
        %p210 = pneg %p108
        %p211 = pneg %p105
        %s212 = sand.u32 %s95, 1
        %s213 = scalar_lea.sflag [#allocation5], %s212
        %s214 = sand.u32 %s95, 1
        %s215 = smul.addr %s214, 32
        %s216 = scalar_lea.vmem [#allocation9], %s215
        %s217 = smul.u32 2, %s19
        %s218 = smul.u32 2, %s19
        %v219 = vld [vmem:[#allocation3] sm:$0xff]
        %v220 = vld [vmem:[#allocation3 + $0x8] sm:$0xff]
        %v221 = vld [vmem:[#allocation6] sm:$0xff]
        %v222 = vld [vmem:[#allocation6 + $0x8] sm:$0xff]
        %v223 = vld [vmem:[%s194] sm:$0xff]
        %v224 = vld [vmem:[%s194 + $0x8] sm:$0xff]
        %v225 = vld [vmem:[%s194 + $0x10] sm:$0xff]
        %v226 = vld [vmem:[%s194 + $0x18] sm:$0xff]
        %vm227 = vcmask 130048
        %v229 = vsel %vm227, %v223, 0
        %v232 = vsel %vm227, %v224, 0
        %v235 = vsel %vm227, %v225, 0
        %v238 = vsel %vm227, %v226, 0
        %240 = vmatprep.subr.mxu0 0.0
        %241 = vmatpush1.msra.mxu0 0.0
        %242 = vmatprep.subr.mxu0 0.0
        %243 = vmatpush1.msra.mxu0 0.0
        %244 = vmatprep.subr.mxu0 0.0
        %245 = vmatpush1.msra.mxu0 0.0
        %246 = vmatprep.subr.mxu0 0.0
        %247 = vmatpush1.msra.mxu0 0.0
        %248 = vmatprep.subr.mxu0 0.0
        %249 = vmatpush1.msra.mxu0 0.0
        %250 = vmatprep.subr.mxu0 0.0
        %251 = vmatpush1.msra.mxu0 0.0
        %252 = vmatprep.subr.mxu0 0.0
        %253 = vmatpush1.msra.mxu0 0.0
        %254 = vmatprep.subr.mxu0 0.0
        %255 = vmatpush1.msra.mxu0 0.0
        %256 = vmatprep.subr.mxu0 0.0
        %257 = vmatpush1.msra.mxu0 0.0
        %258 = vmatprep.subr.mxu0 0.0
        %259 = vmatpush1.msra.mxu0 0.0
        %260 = vmatprep.subr.mxu0 0.0
        %261 = vmatpush1.msra.mxu0 0.0
        %262 = vmatprep.subr.mxu0 0.0
        %263 = vmatpush1.msra.mxu0 0.0
        %264 = vmatprep.subr.mxu0 0.0
        %265 = vmatpush1.msra.mxu0 0.0
        %266 = vmatprep.subr.mxu0 0.0
        %267 = vmatpush1.msra.mxu0 0.0
        %268 = vmatprep.subr.mxu0 0.0
        %269 = vmatpush1.msra.mxu0 %v220
        %270 = vmatprep.subr.mxu0 0.0
        %271 = vmatpush1.msra.mxu0 %v219
        %272 = vmatprep.subr.mxu0 0.0
        %273 = vmatpush2.msra.mxu0 0.0
        %274 = vmatprep.subr.mxu0 0.0
        %275 = vmatpush2.msra.mxu0 0.0
        %276 = vmatprep.subr.mxu0 0.0
        %277 = vmatpush2.msra.mxu0 0.0
        %278 = vmatprep.subr.mxu0 0.0
        %279 = vmatpush2.msra.mxu0 0.0
        %280 = vmatprep.subr.mxu0 0.0
        %281 = vmatpush2.msra.mxu0 0.0
        %282 = vmatprep.subr.mxu0 0.0
        %283 = vmatpush2.msra.mxu0 0.0
        %284 = vmatprep.subr.mxu0 0.0
        %285 = vmatpush2.msra.mxu0 0.0
        %286 = vmatprep.subr.mxu0 0.0
        %287 = vmatpush2.msra.mxu0 0.0
        %288 = vmatprep.subr.mxu0 0.0
        %289 = vmatpush2.msra.mxu0 0.0
        %290 = vmatprep.subr.mxu0 0.0
        %291 = vmatpush2.msra.mxu0 0.0
        %292 = vmatprep.subr.mxu0 0.0
        %293 = vmatpush2.msra.mxu0 0.0
        %294 = vmatprep.subr.mxu0 0.0
        %295 = vmatpush2.msra.mxu0 0.0
        %296 = vmatprep.subr.mxu0 0.0
        %297 = vmatpush2.msra.mxu0 0.0
        %298 = vmatprep.subr.mxu0 0.0
        %299 = vmatpush2.msra.mxu0 0.0
        %300 = vmatprep.subr.mxu0 0.0
        %301 = vmatpush2.msra.mxu0 0.0
        %302 = vmatprep.subr.mxu0 0.0
        %303 = vmatpush2.msra.mxu0 0.0
        %304 = vmatprep.mubr.f32.mxu0 0.0
        %305 = vmatmul.mubr.f32.gmra.mxu0 %v229
        %v306 = vpop.f32.mrf.mxu0
        %v307 = vadd.f32 0.0, %v306
        %v308 = vpop.f32.mrf.mxu0
        %309 = vmatprep.mubr.f32.mxu0 0.0
        %310 = vmatmul.mubr.f32.gmra.mxu0 %v232
        %v311 = vpop.f32.mrf.mxu0
        %v312 = vadd.f32 0.0, %v311
        %v313 = vpop.f32.mrf.mxu0
        %314 = vmatprep.mubr.f32.mxu0 0.0
        %315 = vmatmul.mubr.f32.gmra.mxu0 %v235
        %v316 = vpop.f32.mrf.mxu0
        %v317 = vadd.f32 0.0, %v316
        %v318 = vpop.f32.mrf.mxu0
        %319 = vmatprep.mubr.f32.mxu0 0.0
        %320 = vmatmul.mubr.f32.gmra.mxu0 %v238
        %v321 = vpop.f32.mrf.mxu0
        %v322 = vadd.f32 0.0, %v321
        %v323 = vpop.f32.mrf.mxu0
        %324 = vdwg.mxu0
        %325 = vst.msk [vmem:[#allocation2] sm:$0xff] %vm227, %v307
        %326 = vst.msk [vmem:[#allocation2 + $0x8] sm:$0xff] %vm227, %v312
        %327 = vst.msk [vmem:[#allocation2 + $0x10] sm:$0xff] %vm227, %v317
        %328 = vst.msk [vmem:[#allocation2 + $0x18] sm:$0xff] %vm227, %v322
        %v329 = vld [vmem:[#allocation2] sm:$0xff]
        %v330 = vld [vmem:[#allocation2 + $0x8] sm:$0xff]
        %v332 = vsel %vm227, %v221, 0
        %v335 = vsel %vm227, %v222, 0
        %337 = vmatprep.subr.mxu0 0.0
        %338 = vmatpush1.msra.mxu0 0.0
        %339 = vmatprep.subr.mxu0 0.0
        %340 = vmatpush1.msra.mxu0 0.0
        %341 = vmatprep.subr.mxu0 0.0
        %342 = vmatpush1.msra.mxu0 0.0
        %343 = vmatprep.subr.mxu0 0.0
        %344 = vmatpush1.msra.mxu0 0.0
        %345 = vmatprep.subr.mxu0 0.0
        %346 = vmatpush1.msra.mxu0 0.0
        %347 = vmatprep.subr.mxu0 0.0
        %348 = vmatpush1.msra.mxu0 0.0
        %349 = vmatprep.subr.mxu0 0.0
        %350 = vmatpush1.msra.mxu0 0.0
        %351 = vmatprep.subr.mxu0 0.0
        %352 = vmatpush1.msra.mxu0 0.0
        %353 = vmatprep.subr.mxu0 0.0
        %354 = vmatpush1.msra.mxu0 0.0
        %355 = vmatprep.subr.mxu0 0.0
        %356 = vmatpush1.msra.mxu0 0.0
        %357 = vmatprep.subr.mxu0 0.0
        %358 = vmatpush1.msra.mxu0 0.0
        %359 = vmatprep.subr.mxu0 0.0
        %360 = vmatpush1.msra.mxu0 0.0
        %361 = vmatprep.subr.mxu0 0.0
        %362 = vmatpush1.msra.mxu0 0.0
        %363 = vmatprep.subr.mxu0 0.0
        %364 = vmatpush1.msra.mxu0 0.0
        %365 = vmatprep.subr.mxu0 0.0
        %366 = vmatpush1.msra.mxu0 %v330
        %367 = vmatprep.subr.mxu0 0.0
        %368 = vmatpush1.msra.mxu0 %v329
        %369 = vmatprep.subr.mxu0 0.0
        %370 = vmatpush2.msra.mxu0 0.0
        %371 = vmatprep.subr.mxu0 0.0
        %372 = vmatpush2.msra.mxu0 0.0
        %373 = vmatprep.subr.mxu0 0.0
        %374 = vmatpush2.msra.mxu0 0.0
        %375 = vmatprep.subr.mxu0 0.0
        %376 = vmatpush2.msra.mxu0 0.0
        %377 = vmatprep.subr.mxu0 0.0
        %378 = vmatpush2.msra.mxu0 0.0
        %379 = vmatprep.subr.mxu0 0.0
        %380 = vmatpush2.msra.mxu0 0.0
        %381 = vmatprep.subr.mxu0 0.0
        %382 = vmatpush2.msra.mxu0 0.0
        %383 = vmatprep.subr.mxu0 0.0
        %384 = vmatpush2.msra.mxu0 0.0
        %385 = vmatprep.subr.mxu0 0.0
        %386 = vmatpush2.msra.mxu0 0.0
        %387 = vmatprep.subr.mxu0 0.0
        %388 = vmatpush2.msra.mxu0 0.0
        %389 = vmatprep.subr.mxu0 0.0
        %390 = vmatpush2.msra.mxu0 0.0
        %391 = vmatprep.subr.mxu0 0.0
        %392 = vmatpush2.msra.mxu0 0.0
        %393 = vmatprep.subr.mxu0 0.0
        %394 = vmatpush2.msra.mxu0 0.0
        %395 = vmatprep.subr.mxu0 0.0
        %396 = vmatpush2.msra.mxu0 0.0
        %397 = vmatprep.subr.mxu0 0.0
        %398 = vmatpush2.msra.mxu0 0.0
        %399 = vmatprep.subr.mxu0 0.0
        %400 = vmatpush2.msra.mxu0 0.0
        %401 = vmatprep.mubr.f32.mxu0 0.0
        %402 = vmatmul.mubr.f32.gmra.mxu0 %v332
        %v403 = vpop.f32.mrf.mxu0
        %v404 = vadd.f32 0.0, %v403
        %v405 = vpop.f32.mrf.mxu0
        %406 = vmatprep.mubr.f32.mxu0 0.0
        %407 = vmatmul.mubr.f32.gmra.mxu0 %v335
        %v408 = vpop.f32.mrf.mxu0
        %v409 = vadd.f32 0.0, %v408
        %v410 = vpop.f32.mrf.mxu0
        %411 = vdwg.mxu0
        %412 = vst.msk [vmem:[%s216] sm:$0xff] %vm227, %v404
        %413 = vst.msk [vmem:[%s216 + $0x8] sm:$0xff] %vm227, %v409
        %s414 = scalar_lea.vmem [#allocation2], 16
        %v415 = vld [vmem:[%s414] sm:$0xff]
        %v416 = vld [vmem:[%s414 + $0x8] sm:$0xff]
        %417 = vmatprep.subr.mxu0 0.0
        %418 = vmatpush1.msra.mxu0 0.0
        %419 = vmatprep.subr.mxu0 0.0
        %420 = vmatpush1.msra.mxu0 0.0
        %421 = vmatprep.subr.mxu0 0.0
        %422 = vmatpush1.msra.mxu0 0.0
        %423 = vmatprep.subr.mxu0 0.0
        %424 = vmatpush1.msra.mxu0 0.0
        %425 = vmatprep.subr.mxu0 0.0
        %426 = vmatpush1.msra.mxu0 0.0
        %427 = vmatprep.subr.mxu0 0.0
        %428 = vmatpush1.msra.mxu0 0.0
        %429 = vmatprep.subr.mxu0 0.0
        %430 = vmatpush1.msra.mxu0 0.0
        %431 = vmatprep.subr.mxu0 0.0
        %432 = vmatpush1.msra.mxu0 0.0
        %433 = vmatprep.subr.mxu0 0.0
        %434 = vmatpush1.msra.mxu0 0.0
        %435 = vmatprep.subr.mxu0 0.0
        %436 = vmatpush1.msra.mxu0 0.0
        %437 = vmatprep.subr.mxu0 0.0
        %438 = vmatpush1.msra.mxu0 0.0
        %439 = vmatprep.subr.mxu0 0.0
        %440 = vmatpush1.msra.mxu0 0.0
        %441 = vmatprep.subr.mxu0 0.0
        %442 = vmatpush1.msra.mxu0 0.0
        %443 = vmatprep.subr.mxu0 0.0
        %444 = vmatpush1.msra.mxu0 0.0
        %445 = vmatprep.subr.mxu0 0.0
        %446 = vmatpush1.msra.mxu0 %v416
        %447 = vmatprep.subr.mxu0 0.0
        %448 = vmatpush1.msra.mxu0 %v415
        %449 = vmatprep.subr.mxu0 0.0
        %450 = vmatpush2.msra.mxu0 0.0
        %451 = vmatprep.subr.mxu0 0.0
        %452 = vmatpush2.msra.mxu0 0.0
        %453 = vmatprep.subr.mxu0 0.0
        %454 = vmatpush2.msra.mxu0 0.0
        %455 = vmatprep.subr.mxu0 0.0
        %456 = vmatpush2.msra.mxu0 0.0
        %457 = vmatprep.subr.mxu0 0.0
        %458 = vmatpush2.msra.mxu0 0.0
        %459 = vmatprep.subr.mxu0 0.0
        %460 = vmatpush2.msra.mxu0 0.0
        %461 = vmatprep.subr.mxu0 0.0
        %462 = vmatpush2.msra.mxu0 0.0
        %463 = vmatprep.subr.mxu0 0.0
        %464 = vmatpush2.msra.mxu0 0.0
        %465 = vmatprep.subr.mxu0 0.0
        %466 = vmatpush2.msra.mxu0 0.0
        %467 = vmatprep.subr.mxu0 0.0
        %468 = vmatpush2.msra.mxu0 0.0
        %469 = vmatprep.subr.mxu0 0.0
        %470 = vmatpush2.msra.mxu0 0.0
        %471 = vmatprep.subr.mxu0 0.0
        %472 = vmatpush2.msra.mxu0 0.0
        %473 = vmatprep.subr.mxu0 0.0
        %474 = vmatpush2.msra.mxu0 0.0
        %475 = vmatprep.subr.mxu0 0.0
        %476 = vmatpush2.msra.mxu0 0.0
        %477 = vmatprep.subr.mxu0 0.0
        %478 = vmatpush2.msra.mxu0 0.0
        %479 = vmatprep.subr.mxu0 0.0
        %480 = vmatpush2.msra.mxu0 0.0
        %481 = vmatprep.mubr.f32.mxu0 0.0
        %482 = vmatmul.mubr.f32.gmra.mxu0 %v332
        %v483 = vpop.f32.mrf.mxu0
        %v484 = vadd.f32 0.0, %v483
        %v485 = vpop.f32.mrf.mxu0
        %486 = vmatprep.mubr.f32.mxu0 0.0
        %487 = vmatmul.mubr.f32.gmra.mxu0 %v335
        %v488 = vpop.f32.mrf.mxu0
        %v489 = vadd.f32 0.0, %v488
        %v490 = vpop.f32.mrf.mxu0
        %491 = vdwg.mxu0
        %s492 = scalar_lea.vmem %s216, 16 [#allocation9]
        %493 = vst.msk [vmem:[%s492] sm:$0xff] %vm227, %v484
        %494 = vst.msk [vmem:[%s492 + $0x8] sm:$0xff] %vm227, %v489
        %s495 = sand.u32 %s95, 1
        %s496 = scalar_lea.sflag [#allocation5], %s495
        %s497 = sand.u32 %s95, 1
        %s498 = smul.addr %s497, 32
        %s499 = scalar_lea.vmem [#allocation9], %s498
        // Predicated region
        $region45: #{tpu_custom_call.1} parent=31 // pred_check
          %p500 = pneg %p105
        $region46: #{tpu_custom_call.1} parent=31 // pred_check_branch
          %502 = sbr.rel (%p500) target = $region48
        $region47: #{tpu_custom_call.1} parent=31 // pred_region
          %s503 = smul.u32 2, %s19
          %s505 = ssub.s32 512, 512
          %506 = vsyncadd %s496, %s505
          %s507 = smul.addr %s503, 2
          %s508 = smul.addr %s507, 128
          %s509 = scalar_lea.hbm %s3, %s508
          %s510 = sshll.u32 %s499, 4
          %s511 = int_to_ptr.vmem [resolvable:$true] %s510
          %516 = dma.vmem_to_hbm [thread:$0]  %s511, 512, %s509, %s496, 128, 128, 8
        $region48: #{tpu_custom_call.1} parent=31 // pred_fallthru
          _
      $region32: #{tpu_custom_call.1} parent=5 // pred_fallthru
        _
      %p517 = scmp.le.s32.totalorder 2, %s14
      // Predicated region
      $region49: #{tpu_custom_call.1} parent=5 // pred_check
        %p518 = pneg %p517
      $region50: #{tpu_custom_call.1} parent=5 // pred_check_branch
        %520 = sbr.rel (%p518) target = $region52
      $region51: #{tpu_custom_call.1} parent=5 // pred_region
        %s521 = ssub.s32 %s14, 2
        // Predicated region
        $region53: #{tpu_custom_call.1} parent=51 // pred_check
          %p522 = pneg %p111
        $region54: #{tpu_custom_call.1} parent=51 // pred_check_branch
          %524 = sbr.rel (%p522) target = $region56
        $region55: #{tpu_custom_call.1} parent=51 // pred_region
          %s525 = sand.u32 %s96, 1
          %s526 = scalar_lea.sflag [#allocation5], %s525
          %s527 = sand.u32 %s96, 1
          %s528 = smul.addr %s527, 32
          %s529 = scalar_lea.vmem [#allocation9], %s528
          %530 = dma.done %s526, 512
        $region56: #{tpu_custom_call.1} parent=51 // pred_fallthru
          _
      $region52: #{tpu_custom_call.1} parent=5 // pred_fallthru
        _
    $region6: #{tpu_custom_call.1} parent=1 // loop_footer
      %s18 = sadd.s32 1, %s14
    $region7: #{tpu_custom_call.1} parent=1 // loop_footer_branch
      %13 = sbr.rel target = $region3
    $region8: #{tpu_custom_call.1} parent=1 // loop_exit
      _
    %531 = vsyncpa [#allocation4], 1
    %s532 = scalar_lea.sflag [#allocation4], 1
    %533 = vsyncpa %s532, 1
    %534 = vsyncpa [#allocation7], 1
    %535 = vsyncpa [#allocation5], 1
    %s536 = scalar_lea.sflag [#allocation5], 1
    %537 = vsyncpa %s536, 1

</llo_original>
